<compile_context>
chip_gen: v7x
topology: tpu7x:2x2x1
jax: 0.10.0
libtpu: 0.0.40
codegen_flags: <defaults>
</compile_context>

<pallas_src>
import jax
import jax.numpy as jnp
from jax import lax
from jax.experimental import pallas as pl
from jax.experimental.pallas import tpu as pltpu

TB = 256                                   # pairs per grid step (multiple of 128 lanes)
_VMEM_TABLE_BUDGET = 24 * 1024 * 1024      # conservative byte budget for resident tables


def _mf_kernel(uids_ref, iids_ref, ut_ref, vt_ref, o_ref):
    """One grid step: TB (user, item) pairs.

    ut_ref / vt_ref hold the *transposed* factor tables (latentDim, numRows),
    VMEM-resident across the whole grid.  The gather is a one-hot matmul on the
    MXU keeping the batch on the 128-lane axis, so the multiply, the latent-dim
    (sublane) reduction and the output store are all lane-dense.
    """
    uids = uids_ref[...]                    # (1, TB) int32
    iids = iids_ref[...]                    # (1, TB) int32
    tb = uids.shape[1]
    nu = ut_ref.shape[1]
    nv = vt_ref.shape[1]

    # One-hot selection matrices with the batch on the lane dimension: (numRows, TB).
    oh_u = (lax.broadcasted_iota(jnp.int32, (nu, tb), 0) == uids).astype(ut_ref.dtype)
    oh_v = (lax.broadcasted_iota(jnp.int32, (nv, tb), 0) == iids).astype(vt_ref.dtype)

    # Gather rows via MXU: (D, numRows) @ (numRows, TB) -> (D, TB).
    u_t = jnp.dot(ut_ref[...], oh_u, preferred_element_type=jnp.float32)
    v_t = jnp.dot(vt_ref[...], oh_v, preferred_element_type=jnp.float32)

    # Elementwise product + latent-dim (sublane) reduction -> lane-dense (1, TB).
    o_ref[...] = jnp.sum(u_t * v_t, axis=0, keepdims=True).astype(o_ref.dtype)


def matrix_factorization_forward(user_factors, item_factors, user_ids, item_ids):
    """Pallas equivalent of MatrixFactorization.forward."""
    B = user_ids.shape[0]
    nu, d = user_factors.shape
    nv, _ = item_factors.shape

    table_bytes = (user_factors.size + item_factors.size) * user_factors.dtype.itemsize
    assert table_bytes <= _VMEM_TABLE_BUDGET, "factor tables too large for VMEM-resident path"
    # TODO(synk): for tables that do not fit VMEM, add a double-buffered HBM
    # DMA-gather fallback (prefetch block b+1's rows while computing block b).

    # Pad the batch up to a multiple of TB (padded ids are 0, results sliced off).
    b_pad = ((B + TB - 1) // TB) * TB
    pad = b_pad - B
    uids = jnp.pad(user_ids.astype(jnp.int32), (0, pad)).reshape(1, b_pad)
    iids = jnp.pad(item_ids.astype(jnp.int32), (0, pad)).reshape(1, b_pad)

    # Layout plumbing outside the kernel: transposed tables so the in-kernel
    # gather is a plain (D, N) @ (N, TB) matmul with the batch on the lanes.
    u_t = user_factors.T                    # (D, nu)
    v_t = item_factors.T                    # (D, nv)

    out = pl.pallas_call(
        _mf_kernel,
        out_shape=jax.ShapeDtypeStruct((1, b_pad), jnp.float32),
        grid=(b_pad // TB,),
        in_specs=[
            pl.BlockSpec((1, TB), lambda b: (0, b)),      # user ids (lane-dense)
            pl.BlockSpec((1, TB), lambda b: (0, b)),      # item ids (lane-dense)
            pl.BlockSpec((d, nu), lambda b: (0, 0)),      # user table, VMEM-resident
            pl.BlockSpec((d, nv), lambda b: (0, 0)),      # item table, VMEM-resident
        ],
        out_specs=pl.BlockSpec((1, TB), lambda b: (0, b)),
        compiler_params=pltpu.CompilerParams(
            dimension_semantics=("parallel",)),           # megacore-shardable on v7x
    )(uids, iids, u_t, v_t)
    return out[0, :B]


if __name__ == "__main__":
    user_size, num_of_size, latent_dim = 64, 48, 32
    batch = 16

    key = jax.random.PRNGKey(0)
    k_u, k_v, k_uid, k_iid = jax.random.split(key, 4)

    # torch.nn.init.normal_(..., std=0.01) equivalents, deterministic.
    user_factors = (0.01 * jax.random.normal(k_u, (user_size, latent_dim))).astype(jnp.float32)
    item_factors = (0.01 * jax.random.normal(k_v, (num_of_size, latent_dim))).astype(jnp.float32)

    user_ids = jax.random.randint(k_uid, (batch,), 0, user_size, dtype=jnp.int32)
    item_ids = jax.random.randint(k_iid, (batch,), 0, num_of_size, dtype=jnp.int32)

    out = matrix_factorization_forward(user_factors, item_factors, user_ids, item_ids)
    out = jax.block_until_ready(out)

    # Pure-JAX reference for the PyTorch forward semantics.
    ref = jnp.sum(user_factors[user_ids] * item_factors[item_ids], axis=-1)
    assert out.shape == (batch,)
    assert jnp.allclose(out, ref, rtol=1e-5, atol=1e-7), (out, ref)

    print("KERNEL_OK")
</pallas_src>

<mosaic_0001>
module attributes {stable_mosaic.version = 11 : i64} {
  func.func @_mf_kernel(%arg0: i32, %arg1: memref<1x256xi32, #tpu.memory_space<vmem>>, %arg2: memref<1x256xi32, #tpu.memory_space<vmem>>, %arg3: memref<32x64xf32, #tpu.memory_space<vmem>>, %arg4: memref<32x48xf32, #tpu.memory_space<vmem>>, %arg5: memref<1x256xf32, #tpu.memory_space<vmem>>) attributes {dimension_semantics = [#tpu.dimension_semantics<parallel>], iteration_bounds = array<i64: 1>, scalar_prefetch = 0 : i64, scratch_operands = 0 : i64, tpu.core_type = #tpu.core_type<tc>, window_params = [{transform_indices = @transform_0, window_bounds = array<i64: 1, 256>}, {transform_indices = @transform_1, window_bounds = array<i64: 1, 256>}, {pipeline_mode = #tpu.pipeline_mode<synchronous>, transform_indices = @transform_2, window_bounds = array<i64: 32, 64>}, {pipeline_mode = #tpu.pipeline_mode<synchronous>, transform_indices = @transform_3, window_bounds = array<i64: 32, 48>}, {transform_indices = @transform_4, window_bounds = array<i64: 1, 256>}]} {
    %c0 = arith.constant 0 : index
    %c0_0 = arith.constant 0 : index
    %0 = vector.load %arg1[%c0, %c0_0] : memref<1x256xi32, #tpu.memory_space<vmem>>, vector<1x256xi32>
    %c0_1 = arith.constant 0 : index
    %c0_2 = arith.constant 0 : index
    %1 = vector.load %arg2[%c0_1, %c0_2] : memref<1x256xi32, #tpu.memory_space<vmem>>, vector<1x256xi32>
    %2 = tpu.iota {dimensions = array<i32: 0>} : vector<64x256xi32>
    %3 = vector.broadcast %0 : vector<1x256xi32> to vector<64x256xi32>
    %4 = arith.cmpi eq, %2, %3 : vector<64x256xi32>
    %5 = arith.extui %4 : vector<64x256xi1> to vector<64x256xi32>
    %6 = arith.sitofp %5 : vector<64x256xi32> to vector<64x256xf32>
    %7 = tpu.iota {dimensions = array<i32: 0>} : vector<48x256xi32>
    %8 = vector.broadcast %1 : vector<1x256xi32> to vector<48x256xi32>
    %9 = arith.cmpi eq, %7, %8 : vector<48x256xi32>
    %10 = arith.extui %9 : vector<48x256xi1> to vector<48x256xi32>
    %11 = arith.sitofp %10 : vector<48x256xi32> to vector<48x256xf32>
    %c0_3 = arith.constant 0 : index
    %c0_4 = arith.constant 0 : index
    %12 = vector.load %arg3[%c0_3, %c0_4] : memref<32x64xf32, #tpu.memory_space<vmem>>, vector<32x64xf32>
    %cst = arith.constant dense<0.000000e+00> : vector<32x256xf32>
    %13 = tpu.matmul %12, %6, %cst {dimension_numbers = #tpu.dot_dimension_numbers<[1], [0], [0], [1], [0, 0, 1, 1], [], []>} : vector<32x64xf32>, vector<64x256xf32>, vector<32x256xf32> -> vector<32x256xf32>
    %c0_5 = arith.constant 0 : index
    %c0_6 = arith.constant 0 : index
    %14 = vector.load %arg4[%c0_5, %c0_6] : memref<32x48xf32, #tpu.memory_space<vmem>>, vector<32x48xf32>
    %cst_7 = arith.constant dense<0.000000e+00> : vector<32x256xf32>
    %15 = tpu.matmul %14, %11, %cst_7 {dimension_numbers = #tpu.dot_dimension_numbers<[1], [0], [0], [1], [0, 0, 1, 1], [], []>} : vector<32x48xf32>, vector<48x256xf32>, vector<32x256xf32> -> vector<32x256xf32>
    %16 = arith.mulf %13, %15 : vector<32x256xf32>
    %cst_8 = arith.constant dense<0.000000e+00> : vector<256xf32>
    %17 = vector.multi_reduction <add>, %16, %cst_8 [0] : vector<32x256xf32> to vector<256xf32>
    %18 = vector.shape_cast %17 : vector<256xf32> to vector<1x256xf32>
    %c0_9 = arith.constant 0 : index
    %c0_10 = arith.constant 0 : index
    %19 = vector.load %arg5[%c0_9, %c0_10] : memref<1x256xf32, #tpu.memory_space<vmem>>, vector<1x256xf32>
    tpu.vector_store %arg5[%c0_9, %c0_10], %18 {strides = array<i32>} : memref<1x256xf32, #tpu.memory_space<vmem>>, vector<1x256xf32>,
    return
  }
  func.func @transform_0(%arg0: i32) -> (i32, i32) {
    %c0_i32 = arith.constant 0 : i32
    %c0_i32_0 = arith.constant 0 : i32
    return %c0_i32, %arg0 : i32, i32
  }
  func.func @transform_1(%arg0: i32) -> (i32, i32) {
    %c0_i32 = arith.constant 0 : i32
    %c0_i32_0 = arith.constant 0 : i32
    return %c0_i32, %arg0 : i32, i32
  }
  func.func @transform_2(%arg0: i32) -> (i32, i32) {
    %c0_i32 = arith.constant 0 : i32
    %c0_i32_0 = arith.constant 0 : i32
    %c0_i32_1 = arith.constant 0 : i32
    return %c0_i32, %c0_i32_0 : i32, i32
  }
  func.func @transform_3(%arg0: i32) -> (i32, i32) {
    %c0_i32 = arith.constant 0 : i32
    %c0_i32_0 = arith.constant 0 : i32
    %c0_i32_1 = arith.constant 0 : i32
    return %c0_i32, %c0_i32_0 : i32, i32
  }
  func.func @transform_4(%arg0: i32) -> (i32, i32) {
    %c0_i32 = arith.constant 0 : i32
    %c0_i32_0 = arith.constant 0 : i32
    return %c0_i32, %arg0 : i32, i32
  }
}

</mosaic_0001>

<llo_original>
// kernel: tpu_custom_call.1
$region0: #{tpu_custom_call.1}
  #allocation0 [shape = 'u32[]', space=smem, size = 0x4, offset = 0x4, fixed_abs, tag = 'smem constant byte address 0x4 - core index']
  #allocation1 [shape = 'u32[144,128]{1,0:T(1,128)}', space=vmem, size = 0x12000, scoped, tag = 'internal scratch']
  %s0 = inlined_call_operand.hbm [shape: s32[1,256], index: 0, kind: input, shape index: {}]
  %s1 = inlined_call_operand.vmem [shape: s32[1,256], index: 1, kind: input, shape index: {}]
  %s2 = inlined_call_operand.hbm [shape: f32[32,64], index: 2, kind: input, shape index: {}]
  %s3 = inlined_call_operand.hbm [shape: f32[32,48], index: 3, kind: input, shape index: {}]
  %s4 = inlined_call_operand.hbm [shape: f32[1,256], index: 4, kind: output, shape index: {}]
  %s5 = sld [smem:[#allocation0]]
  $region38: #{tpu_custom_call.1} parent=0
    _
  %s7 = ssub.s32 1, %s5
  %s8 = scalar_select 0, %s7, %s5
  $region1: #{tpu_custom_call.1} parent=0
    #allocation2 [shape = 'u8[1024]{0}', space=vmem, size = 0x400, scoped, tag = 'input window, operand 0, single buffered']
    #allocation3 [shape = 's32[1]{0}', space=sflag, size = 0x4, scoped, tag = 'scoped memory for tpu_custom_call.1']
    #allocation4 [shape = 's32[1]{0}', space=sflag, size = 0x4, scoped, tag = 'scoped memory for tpu_custom_call.1']
    #allocation5 [shape = 'u8[16384]{0}', space=vmem, size = 0x4000, scoped, tag = 'input window, operand 2, single buffered']
    #allocation6 [shape = 's32[1]{0}', space=sflag, size = 0x4, scoped, tag = 'scoped memory for tpu_custom_call.1']
    #allocation7 [shape = 'u8[16384]{0}', space=vmem, size = 0x4000, scoped, tag = 'input window, operand 3, single buffered']
    #allocation8 [shape = 'u8[1024]{0}', space=vmem, size = 0x400, scoped, tag = 'output window, operand 0, single buffered']
    %9 = vsyncpa [#allocation3], 0
    %10 = vsyncpa [#allocation6], 0
    %11 = vsyncpa [#allocation4], 0
    // Predicated region
    $region2: #{tpu_custom_call.1} parent=1 // pred_check
      _
    $region3: #{tpu_custom_call.1} parent=1 // pred_check_branch
      %13 = sbr.rel (0) target = $region5
    $region4: #{tpu_custom_call.1} parent=1 // pred_region
      %s15 = ssub.s32 32, 32
      %16 = vsyncadd [#allocation3], %s15
      %s18 = sshll.u32 [#allocation2], 4
      %s19 = int_to_ptr.vmem [resolvable:$true] %s18
      %21 = dma.hbm_to_vmem [thread:$0]  %s0, 32, %s19, [#allocation3]
    $region5: #{tpu_custom_call.1} parent=1 // pred_fallthru
      _
    // Predicated region
    $region6: #{tpu_custom_call.1} parent=1 // pred_check
      _
    $region7: #{tpu_custom_call.1} parent=1 // pred_check_branch
      %23 = sbr.rel (0) target = $region9
    $region8: #{tpu_custom_call.1} parent=1 // pred_region
      _
    $region9: #{tpu_custom_call.1} parent=1 // pred_fallthru
      _
    // Predicated region
    $region10: #{tpu_custom_call.1} parent=1 // pred_check
      _
    $region11: #{tpu_custom_call.1} parent=1 // pred_check_branch
      %25 = sbr.rel (0) target = $region13
    $region12: #{tpu_custom_call.1} parent=1 // pred_region
      %s27 = ssub.s32 512, 512
      %28 = vsyncadd [#allocation6], %s27
      %s29 = sshll.u32 [#allocation5], 4
      %s30 = int_to_ptr.vmem [resolvable:$true] %s29
      %35 = dma.hbm_to_vmem [thread:$0]  %s2, 512, %s30, [#allocation6], 128, 128, 8
    $region13: #{tpu_custom_call.1} parent=1 // pred_fallthru
      _
    // Predicated region
    $region14: #{tpu_custom_call.1} parent=1 // pred_check
      _
    $region15: #{tpu_custom_call.1} parent=1 // pred_check_branch
      %37 = sbr.rel (0) target = $region17
    $region16: #{tpu_custom_call.1} parent=1 // pred_region
      %s39 = ssub.s32 512, 512
      %40 = vsyncadd [#allocation6], %s39
      %s41 = sshll.u32 [#allocation7], 4
      %s42 = int_to_ptr.vmem [resolvable:$true] %s41
      %47 = dma.hbm_to_vmem [thread:$0]  %s3, 512, %s42, [#allocation6], 128, 128, 8
    $region17: #{tpu_custom_call.1} parent=1 // pred_fallthru
      _
    // Predicated region
    $region18: #{tpu_custom_call.1} parent=1 // pred_check
      _
    $region19: #{tpu_custom_call.1} parent=1 // pred_check_branch
      %49 = sbr.rel (0) target = $region21
    $region20: #{tpu_custom_call.1} parent=1 // pred_region
      %50 = dma.done [#allocation3], 32
    $region21: #{tpu_custom_call.1} parent=1 // pred_fallthru
      _
    // Predicated region
    $region22: #{tpu_custom_call.1} parent=1 // pred_check
      _
    $region23: #{tpu_custom_call.1} parent=1 // pred_check_branch
      %52 = sbr.rel (0) target = $region25
    $region24: #{tpu_custom_call.1} parent=1 // pred_region
      %53 = dma.done [#allocation6], 512
    $region25: #{tpu_custom_call.1} parent=1 // pred_fallthru
      _
    // Predicated region
    $region26: #{tpu_custom_call.1} parent=1 // pred_check
      _
    $region27: #{tpu_custom_call.1} parent=1 // pred_check_branch
      %55 = sbr.rel (0) target = $region29
    $region28: #{tpu_custom_call.1} parent=1 // pred_region
      %56 = dma.done [#allocation6], 512
    $region29: #{tpu_custom_call.1} parent=1 // pred_fallthru
      _
    %v57 = vld [vmem:[#allocation2] sm:$0x3]
    %v58 = vld [vmem:[%s1] sm:$0x3]
    %v59 = vlaneseq
    %v60 = vshrl.u32 %v59, 7
    %v61 = vadd.s32 %v60, 8
    %v62 = vadd.s32 %v60, 16
    %v63 = vadd.s32 %v60, 24
    %v64 = vadd.s32 %v60, 32
    %v65 = vadd.s32 %v60, 40
    %v66 = vadd.s32 %v60, 48
    %v67 = vadd.s32 %v60, 56
    %v68 = vlaneseq
    %v69 = vshrl.u32 %v68, 7
    %v70 = vsub.s32 0, %v69
    %v71 = vrot.slane %v57, %v70
    %v72 = vlaneseq
    %v73 = vshrl.u32 %v72, 7
    %v74 = vsub.s32 1, %v73
    %v75 = vrot.slane %v57, %v74
    %vm76 = vcmp.eq.s32.totalorder %v60, %v71
    %vm77 = vcmp.eq.s32.totalorder %v60, %v75
    %vm78 = vcmp.eq.s32.totalorder %v61, %v71
    %vm79 = vcmp.eq.s32.totalorder %v61, %v75
    %vm80 = vcmp.eq.s32.totalorder %v62, %v71
    %vm81 = vcmp.eq.s32.totalorder %v62, %v75
    %vm82 = vcmp.eq.s32.totalorder %v63, %v71
    %vm83 = vcmp.eq.s32.totalorder %v63, %v75
    %vm84 = vcmp.eq.s32.totalorder %v64, %v71
    %vm85 = vcmp.eq.s32.totalorder %v64, %v75
    %vm86 = vcmp.eq.s32.totalorder %v65, %v71
    %vm87 = vcmp.eq.s32.totalorder %v65, %v75
    %vm88 = vcmp.eq.s32.totalorder %v66, %v71
    %vm89 = vcmp.eq.s32.totalorder %v66, %v75
    %vm90 = vcmp.eq.s32.totalorder %v67, %v71
    %vm91 = vcmp.eq.s32.totalorder %v67, %v75
    %v92 = vsel %vm76, 1, 0
    %v93 = vsel %vm77, 1, 0
    %v94 = vsel %vm78, 1, 0
    %v95 = vsel %vm79, 1, 0
    %v96 = vsel %vm80, 1, 0
    %v97 = vsel %vm81, 1, 0
    %v98 = vsel %vm82, 1, 0
    %v99 = vsel %vm83, 1, 0
    %v100 = vsel %vm84, 1, 0
    %v101 = vsel %vm85, 1, 0
    %v102 = vsel %vm86, 1, 0
    %v103 = vsel %vm87, 1, 0
    %v104 = vsel %vm88, 1, 0
    %v105 = vsel %vm89, 1, 0
    %v106 = vsel %vm90, 1, 0
    %v107 = vsel %vm91, 1, 0
    %v108 = vcvt.s32.f32 %v92
    %v109 = vcvt.s32.f32 %v93
    %v110 = vcvt.s32.f32 %v94
    %v111 = vcvt.s32.f32 %v95
    %v112 = vcvt.s32.f32 %v96
    %v113 = vcvt.s32.f32 %v97
    %v114 = vcvt.s32.f32 %v98
    %v115 = vcvt.s32.f32 %v99
    %v116 = vcvt.s32.f32 %v100
    %v117 = vcvt.s32.f32 %v101
    %v118 = vcvt.s32.f32 %v102
    %v119 = vcvt.s32.f32 %v103
    %v120 = vcvt.s32.f32 %v104
    %v121 = vcvt.s32.f32 %v105
    %v122 = vcvt.s32.f32 %v106
    %v123 = vcvt.s32.f32 %v107
    %v124 = vlaneseq
    %v125 = vshrl.u32 %v124, 7
    %v126 = vsub.s32 0, %v125
    %v127 = vrot.slane %v58, %v126
    %v128 = vlaneseq
    %v129 = vshrl.u32 %v128, 7
    %v130 = vsub.s32 1, %v129
    %v131 = vrot.slane %v58, %v130
    %vm132 = vcmp.eq.s32.totalorder %v60, %v127
    %vm133 = vcmp.eq.s32.totalorder %v60, %v131
    %vm134 = vcmp.eq.s32.totalorder %v61, %v127
    %vm135 = vcmp.eq.s32.totalorder %v61, %v131
    %vm136 = vcmp.eq.s32.totalorder %v62, %v127
    %vm137 = vcmp.eq.s32.totalorder %v62, %v131
    %vm138 = vcmp.eq.s32.totalorder %v63, %v127
    %vm139 = vcmp.eq.s32.totalorder %v63, %v131
    %vm140 = vcmp.eq.s32.totalorder %v64, %v127
    %vm141 = vcmp.eq.s32.totalorder %v64, %v131
    %vm142 = vcmp.eq.s32.totalorder %v65, %v127
    %vm143 = vcmp.eq.s32.totalorder %v65, %v131
    %v144 = vsel %vm132, 1, 0
    %v145 = vsel %vm133, 1, 0
    %v146 = vsel %vm134, 1, 0
    %v147 = vsel %vm135, 1, 0
    %v148 = vsel %vm136, 1, 0
    %v149 = vsel %vm137, 1, 0
    %v150 = vsel %vm138, 1, 0
    %v151 = vsel %vm139, 1, 0
    %v152 = vsel %vm140, 1, 0
    %v153 = vsel %vm141, 1, 0
    %v154 = vsel %vm142, 1, 0
    %v155 = vsel %vm143, 1, 0
    %v156 = vcvt.s32.f32 %v144
    %v157 = vcvt.s32.f32 %v145
    %v158 = vcvt.s32.f32 %v146
    %v159 = vcvt.s32.f32 %v147
    %v160 = vcvt.s32.f32 %v148
    %v161 = vcvt.s32.f32 %v149
    %v162 = vcvt.s32.f32 %v150
    %v163 = vcvt.s32.f32 %v151
    %v164 = vcvt.s32.f32 %v152
    %v165 = vcvt.s32.f32 %v153
    %v166 = vcvt.s32.f32 %v154
    %v167 = vcvt.s32.f32 %v155
    %v168 = vld [vmem:[#allocation5] sm:$0xff]
    %v169 = vld [vmem:[#allocation5 + $0x8] sm:$0xff]
    %v170 = vld [vmem:[#allocation5 + $0x10] sm:$0xff]
    %v171 = vld [vmem:[#allocation5 + $0x18] sm:$0xff]
    %vm172 = vcmask 523264
    %v174 = vsel %vm172, %v168, 0
    %v177 = vsel %vm172, %v169, 0
    %v180 = vsel %vm172, %v170, 0
    %v183 = vsel %vm172, %v171, 0
    %185 = vmatprep.subr.mxu0 %v109
    %186 = vmatpush1.msra.mxu0 %v108
    %187 = vmatprep.subr.mxu0 %v111
    %188 = vmatpush1.msra.mxu0 %v110
    %189 = vmatprep.subr.mxu0 %v113
    %190 = vmatpush1.msra.mxu0 %v112
    %191 = vmatprep.subr.mxu0 %v115
    %192 = vmatpush1.msra.mxu0 %v114
    %193 = vmatprep.subr.mxu0 %v117
    %194 = vmatpush1.msra.mxu0 %v116
    %195 = vmatprep.subr.mxu0 %v119
    %196 = vmatpush1.msra.mxu0 %v118
    %197 = vmatprep.subr.mxu0 %v121
    %198 = vmatpush1.msra.mxu0 %v120
    %199 = vmatprep.subr.mxu0 %v123
    %200 = vmatpush1.msra.mxu0 %v122
    %201 = vmatprep.subr.mxu0 0.0
    %202 = vmatpush1.msra.mxu0 0.0
    %203 = vmatprep.subr.mxu0 0.0
    %204 = vmatpush1.msra.mxu0 0.0
    %205 = vmatprep.subr.mxu0 0.0
    %206 = vmatpush1.msra.mxu0 0.0
    %207 = vmatprep.subr.mxu0 0.0
    %208 = vmatpush1.msra.mxu0 0.0
    %209 = vmatprep.subr.mxu0 0.0
    %210 = vmatpush1.msra.mxu0 0.0
    %211 = vmatprep.subr.mxu0 0.0
    %212 = vmatpush1.msra.mxu0 0.0
    %213 = vmatprep.subr.mxu0 0.0
    %214 = vmatpush1.msra.mxu0 0.0
    %215 = vmatprep.subr.mxu0 0.0
    %216 = vmatpush1.msra.mxu0 0.0
    %217 = vmatprep.subr.mxu0 0.0
    %218 = vmatpush1.msra.mxu0 0.0
    %219 = vmatprep.subr.mxu0 0.0
    %220 = vmatpush1.msra.mxu0 0.0
    %221 = vmatprep.subr.mxu0 0.0
    %222 = vmatpush1.msra.mxu0 0.0
    %223 = vmatprep.subr.mxu0 0.0
    %224 = vmatpush1.msra.mxu0 0.0
    %225 = vmatprep.subr.mxu0 0.0
    %226 = vmatpush1.msra.mxu0 0.0
    %227 = vmatprep.subr.mxu0 0.0
    %228 = vmatpush1.msra.mxu0 0.0
    %229 = vmatprep.subr.mxu0 0.0
    %230 = vmatpush1.msra.mxu0 0.0
    %231 = vmatprep.subr.mxu0 0.0
    %232 = vmatpush1.msra.mxu0 0.0
    %233 = vmatprep.subr.mxu0 0.0
    %234 = vmatpush1.msra.mxu0 0.0
    %235 = vmatprep.subr.mxu0 0.0
    %236 = vmatpush1.msra.mxu0 0.0
    %237 = vmatprep.subr.mxu0 0.0
    %238 = vmatpush1.msra.mxu0 0.0
    %239 = vmatprep.subr.mxu0 0.0
    %240 = vmatpush1.msra.mxu0 0.0
    %241 = vmatprep.subr.mxu0 0.0
    %242 = vmatpush1.msra.mxu0 0.0
    %243 = vmatprep.subr.mxu0 0.0
    %244 = vmatpush1.msra.mxu0 0.0
    %245 = vmatprep.subr.mxu0 0.0
    %246 = vmatpush1.msra.mxu0 0.0
    %247 = vmatprep.subr.mxu0 0.0
    %248 = vmatpush1.msra.mxu0 0.0
    %249 = vmatprep.mubr.f32.mxu0 0.0
    %250 = vmatmul.mubr.f32.gmra.mrb[0].mxu0 %v174
    %v251 = vpop.f32.mrb[0].mxu0
    %v252 = vadd.f32 0.0, %v251
    %v253 = vpop.f32.mrb[0].mxu0
    %v254 = vadd.f32 0.0, %v253
    %255 = vmatprep.mubr.f32.mxu0 0.0
    %256 = vmatmul.mubr.f32.gmra.mrb[0].mxu0 %v177
    %v257 = vpop.f32.mrb[0].mxu0
    %v258 = vadd.f32 0.0, %v257
    %v259 = vpop.f32.mrb[0].mxu0
    %v260 = vadd.f32 0.0, %v259
    %261 = vmatprep.mubr.f32.mxu0 0.0
    %262 = vmatmul.mubr.f32.gmra.mrb[0].mxu0 %v180
    %v263 = vpop.f32.mrb[0].mxu0
    %v264 = vadd.f32 0.0, %v263
    %v265 = vpop.f32.mrb[0].mxu0
    %v266 = vadd.f32 0.0, %v265
    %267 = vmatprep.mubr.f32.mxu0 0.0
    %268 = vmatmul.mubr.f32.gmra.mrb[0].mxu0 %v183
    %v269 = vpop.f32.mrb[0].mxu0
    %v270 = vadd.f32 0.0, %v269
    %v271 = vpop.f32.mrb[0].mxu0
    %v272 = vadd.f32 0.0, %v271
    %273 = vdwg.mxu0
    %v274 = vld [vmem:[#allocation7] sm:$0xff]
    %v275 = vld [vmem:[#allocation7 + $0x8] sm:$0xff]
    %v276 = vld [vmem:[#allocation7 + $0x10] sm:$0xff]
    %v277 = vld [vmem:[#allocation7 + $0x18] sm:$0xff]
    %vm278 = vcmask 392192
    %v280 = vsel %vm278, %v274, 0
    %v283 = vsel %vm278, %v275, 0
    %v286 = vsel %vm278, %v276, 0
    %v289 = vsel %vm278, %v277, 0
    %291 = vmatprep.subr.mxu0 %v157
    %292 = vmatpush1.msra.mxu0 %v156
    %293 = vmatprep.subr.mxu0 %v159
    %294 = vmatpush1.msra.mxu0 %v158
    %295 = vmatprep.subr.mxu0 %v161
    %296 = vmatpush1.msra.mxu0 %v160
    %297 = vmatprep.subr.mxu0 %v163
    %298 = vmatpush1.msra.mxu0 %v162
    %299 = vmatprep.subr.mxu0 %v165
    %300 = vmatpush1.msra.mxu0 %v164
    %301 = vmatprep.subr.mxu0 %v167
    %302 = vmatpush1.msra.mxu0 %v166
    %303 = vmatprep.subr.mxu0 0.0
    %304 = vmatpush1.msra.mxu0 0.0
    %305 = vmatprep.subr.mxu0 0.0
    %306 = vmatpush1.msra.mxu0 0.0
    %307 = vmatprep.subr.mxu0 0.0
    %308 = vmatpush1.msra.mxu0 0.0
    %309 = vmatprep.subr.mxu0 0.0
    %310 = vmatpush1.msra.mxu0 0.0
    %311 = vmatprep.subr.mxu0 0.0
    %312 = vmatpush1.msra.mxu0 0.0
    %313 = vmatprep.subr.mxu0 0.0
    %314 = vmatpush1.msra.mxu0 0.0
    %315 = vmatprep.subr.mxu0 0.0
    %316 = vmatpush1.msra.mxu0 0.0
    %317 = vmatprep.subr.mxu0 0.0
    %318 = vmatpush1.msra.mxu0 0.0
    %319 = vmatprep.subr.mxu0 0.0
    %320 = vmatpush1.msra.mxu0 0.0
    %321 = vmatprep.subr.mxu0 0.0
    %322 = vmatpush1.msra.mxu0 0.0
    %323 = vmatprep.subr.mxu0 0.0
    %324 = vmatpush1.msra.mxu0 0.0
    %325 = vmatprep.subr.mxu0 0.0
    %326 = vmatpush1.msra.mxu0 0.0
    %327 = vmatprep.subr.mxu0 0.0
    %328 = vmatpush1.msra.mxu0 0.0
    %329 = vmatprep.subr.mxu0 0.0
    %330 = vmatpush1.msra.mxu0 0.0
    %331 = vmatprep.subr.mxu0 0.0
    %332 = vmatpush1.msra.mxu0 0.0
    %333 = vmatprep.subr.mxu0 0.0
    %334 = vmatpush1.msra.mxu0 0.0
    %335 = vmatprep.subr.mxu0 0.0
    %336 = vmatpush1.msra.mxu0 0.0
    %337 = vmatprep.subr.mxu0 0.0
    %338 = vmatpush1.msra.mxu0 0.0
    %339 = vmatprep.subr.mxu0 0.0
    %340 = vmatpush1.msra.mxu0 0.0
    %341 = vmatprep.subr.mxu0 0.0
    %342 = vmatpush1.msra.mxu0 0.0
    %343 = vmatprep.subr.mxu0 0.0
    %344 = vmatpush1.msra.mxu0 0.0
    %345 = vmatprep.subr.mxu0 0.0
    %346 = vmatpush1.msra.mxu0 0.0
    %347 = vmatprep.subr.mxu0 0.0
    %348 = vmatpush1.msra.mxu0 0.0
    %349 = vmatprep.subr.mxu0 0.0
    %350 = vmatpush1.msra.mxu0 0.0
    %351 = vmatprep.subr.mxu0 0.0
    %352 = vmatpush1.msra.mxu0 0.0
    %353 = vmatprep.subr.mxu0 0.0
    %354 = vmatpush1.msra.mxu0 0.0
    %355 = vmatprep.mubr.f32.mxu0 0.0
    %356 = vmatmul.mubr.f32.gmra.mrb[0].mxu0 %v280
    %v357 = vpop.f32.mrb[0].mxu0
    %v358 = vadd.f32 0.0, %v357
    %v359 = vpop.f32.mrb[0].mxu0
    %v360 = vadd.f32 0.0, %v359
    %361 = vmatprep.mubr.f32.mxu0 0.0
    %362 = vmatmul.mubr.f32.gmra.mrb[0].mxu0 %v283
    %v363 = vpop.f32.mrb[0].mxu0
    %v364 = vadd.f32 0.0, %v363
    %v365 = vpop.f32.mrb[0].mxu0
    %v366 = vadd.f32 0.0, %v365
    %367 = vmatprep.mubr.f32.mxu0 0.0
    %368 = vmatmul.mubr.f32.gmra.mrb[0].mxu0 %v286
    %v369 = vpop.f32.mrb[0].mxu0
    %v370 = vadd.f32 0.0, %v369
    %v371 = vpop.f32.mrb[0].mxu0
    %v372 = vadd.f32 0.0, %v371
    %373 = vmatprep.mubr.f32.mxu0 0.0
    %374 = vmatmul.mubr.f32.gmra.mrb[0].mxu0 %v289
    %v375 = vpop.f32.mrb[0].mxu0
    %v376 = vadd.f32 0.0, %v375
    %v377 = vpop.f32.mrb[0].mxu0
    %v378 = vadd.f32 0.0, %v377
    %379 = vdwg.mxu0
    %v380 = vmul.f32 %v252, %v358
    %v381 = vmul.f32 %v254, %v360
    %v382 = vmul.f32 %v258, %v364
    %v383 = vmul.f32 %v260, %v366
    %v384 = vmul.f32 %v264, %v370
    %v385 = vmul.f32 %v266, %v372
    %v386 = vmul.f32 %v270, %v376
    %v387 = vmul.f32 %v272, %v378
    %v388 = vadd.f32 %v380, %v382
    %v389 = vadd.f32 %v388, %v384
    %v390 = vadd.f32 %v389, %v386
    %v391 = vrot.slane %v390, 4
    %v392 = vadd.f32 %v390, %v391
    %v393 = vrot.slane %v392, 2
    %v394 = vadd.f32 %v392, %v393
    %v395 = vrot.slane %v394, 1
    %v396 = vadd.f32 %v394, %v395
    %v397 = vadd.f32 %v381, %v383
    %v398 = vadd.f32 %v397, %v385
    %v399 = vadd.f32 %v398, %v387
    %v400 = vrot.slane %v399, 4
    %v401 = vadd.f32 %v399, %v400
    %v402 = vrot.slane %v401, 2
    %v403 = vadd.f32 %v401, %v402
    %v404 = vrot.slane %v403, 1
    %v405 = vadd.f32 %v403, %v404
    %v408 = vcombine.low %v396, %v405
    %v410 = vunpack.c.l.s4 1966171168
    %v411 = vunpack.c.0.s8 %v410
    %v412 = vlaneseq
    %v413 = vshrl.u32 %v412, 7
    %v414 = vsub.s32 %v411, %v413
    %v415 = vrot.slane %v408, %v414
    %v417 = vunpack.c.l.s4 1966171168
    %v418 = vunpack.c.0.s8 %v417
    %v419 = vlaneseq
    %v420 = vshrl.u32 %v419, 7
    %v421 = vsub.s32 %v418, %v420
    %v422 = vrot.slane %v415, %v421
    %v424 = vlaneseq
    %vm425 = vcmp.ge.s32.totalorder %v424, 0
    %vm426 = vcmp.lt.s32.totalorder %v424, 256
    %vm427 = vmand %vm425, %vm426
    %428 = vst.msk [vmem:[#allocation8] sm:$0x3] %vm427, %v422
    // Predicated region
    $region30: #{tpu_custom_call.1} parent=1 // pred_check
      _
    $region31: #{tpu_custom_call.1} parent=1 // pred_check_branch
      %430 = sbr.rel (0) target = $region33
    $region32: #{tpu_custom_call.1} parent=1 // pred_region
      %s432 = ssub.s32 32, 32
      %433 = vsyncadd [#allocation4], %s432
      %s435 = sshll.u32 [#allocation8], 4
      %s436 = int_to_ptr.vmem [resolvable:$true] %s435
      %438 = dma.vmem_to_hbm [thread:$0]  %s436, 32, %s4, [#allocation4]
    $region33: #{tpu_custom_call.1} parent=1 // pred_fallthru
      _
    // Predicated region
    $region34: #{tpu_custom_call.1} parent=1 // pred_check
      _
    $region35: #{tpu_custom_call.1} parent=1 // pred_check_branch
      %440 = sbr.rel (0) target = $region37
    $region36: #{tpu_custom_call.1} parent=1 // pred_region
      %441 = dma.done [#allocation4], 32
    $region37: #{tpu_custom_call.1} parent=1 // pred_fallthru
      _
    %442 = vsyncpa [#allocation3], 1
    %443 = vsyncpa [#allocation6], 1
    %444 = vsyncpa [#allocation4], 1

</llo_original>
